<compile_context>
chip_gen: v7x
topology: tpu7x:2x2x1
jax: 0.10.0
libtpu: 0.0.40
codegen_flags: <defaults>
</compile_context>

<pallas_src>
import functools

import jax
import jax.numpy as jnp
from jax.experimental import pallas as pl
from jax.experimental.pallas import tpu as pltpu


STATE_DIM = 6
ACTION_DIM = 3
HIDDEN_DIM = 256
PACK_W = ACTION_DIM + STATE_DIM        # 9: action lanes [0,3), next_state lanes [3,9)


# --------------------------------- kernel -----------------------------------

def _pinn_kernel(state_ref,
                 w14_ref, b14_ref, w25_ref, b25_ref, w36_ref, b36_ref, w4ap_ref,
                 out_ref):
    cdt = w14_ref.dtype            # MXU operand dtype (bf16 or f32); accumulation is f32
    s_c = state_ref[...].astype(cdt)                                   # [TB, 6]

    # ---- fused state matmul: lanes [0,256) -> policy L1, [256,512) -> physics L1 state term
    h14 = jnp.dot(s_c, w14_ref[...], preferred_element_type=jnp.float32) + b14_ref[...]
    h1 = jnp.maximum(h14[:, :HIDDEN_DIM], 0.0)        # relu(s @ w1 + b1)
    h4s = h14[:, HIDDEN_DIM:]                         # s @ w4_state + b4   (pre-ReLU)

    # ---- policy_net: L2 + ReLU, head + tanh (lanes [3,9) are tanh(0) = 0) ----
    h2 = jnp.dot(h1.astype(cdt), w25_ref[0], preferred_element_type=jnp.float32) + b25_ref[0]
    h2 = jnp.maximum(h2, 0.0)
    a_full = jnp.tanh(jnp.dot(h2.astype(cdt), w36_ref[0],
                              preferred_element_type=jnp.float32) + b36_ref[0])   # [TB, 9]

    # ---- physics_net on concat([state, action]) expressed as a split matmul ----
    # w4ap rows >= ACTION_DIM are zero, so the padded lanes of a_full contribute nothing.
    h3 = h4s + jnp.dot(a_full.astype(cdt), w4ap_ref[...], preferred_element_type=jnp.float32)
    h3 = jnp.maximum(h3, 0.0)
    h5 = jnp.dot(h3.astype(cdt), w25_ref[1], preferred_element_type=jnp.float32) + b25_ref[1]
    h5 = jnp.maximum(h5, 0.0)
    ns_full = (jnp.dot(h5.astype(cdt), w36_ref[1], preferred_element_type=jnp.float32)
               + b36_ref[1])                                                       # [TB, 9]

    # lane-disjoint padded heads -> single packed store (36 useful bytes / row)
    out_ref[...] = (a_full + ns_full).astype(out_ref.dtype)


_PACKED_ORDER = ("w14", "b14", "w25", "b25", "w36", "b36", "w4ap")


# -------------------------------- wrapper ------------------------------------

def _cdiv(a, b):
    return -(-a // b)


def _round_up(x, m):
    return ((x + m - 1) // m) * m


def _choose_tiling(B, tb_max):
    """Balanced, sublane-aligned batch tiles; >= 2 tiles when B >= 16 (v7x megacore)."""
    min_tiles = 2 if B >= 16 else 1
    n = max(min_tiles, _cdiv(B, tb_max))
    TB = _round_up(_cdiv(B, n), 8)
    n_tiles = max(min_tiles, _cdiv(B, TB))
    return TB, n_tiles


def _const_spec(arr):
    zero = (0,) * arr.ndim
    return pl.BlockSpec(arr.shape, lambda i, _z=zero: _z)   # weights stay VMEM-resident


@functools.partial(jax.jit, static_argnames=("tb",))
def physics_informed_policy_forward(state, packed, *, tb=1024):
    """state: [B, STATE_DIM] f32 -> (action [B, ACTION_DIM], next_state [B, STATE_DIM])."""
    B, sd = state.shape
    assert sd == STATE_DIM

    TB, n_tiles = _choose_tiling(B, tb)
    B_pad = n_tiles * TB
    if B_pad != B:
        state = jnp.pad(state, ((0, B_pad - B), (0, 0)))

    weights = [packed[name] for name in _PACKED_ORDER]

    batch_map = lambda i: (i, 0)      # state / output tiles stream over the grid
    in_specs = ([pl.BlockSpec((TB, STATE_DIM), batch_map)]
                + [_const_spec(w) for w in weights])
    out_spec = pl.BlockSpec((TB, PACK_W), batch_map)

    flops = 2 * B_pad * (STATE_DIM * 2 * HIDDEN_DIM        # fused (w1 | w4_state) matmul
                         + 2 * HIDDEN_DIM * HIDDEN_DIM     # w2, w5
                         + 2 * HIDDEN_DIM * PACK_W         # w3, w6 heads
                         + PACK_W * HIDDEN_DIM)            # action @ w4_action
    weight_bytes = sum(int(w.size) * w.dtype.itemsize for w in weights)
    cost = pl.CostEstimate(
        flops=flops,
        transcendentals=B_pad * PACK_W,
        bytes_accessed=B_pad * (STATE_DIM + PACK_W) * 4 + weight_bytes)

    out = pl.pallas_call(
        _pinn_kernel,
        out_shape=jax.ShapeDtypeStruct((B_pad, PACK_W), jnp.float32),
        grid=(n_tiles,),
        in_specs=in_specs,
        out_specs=out_spec,
        compiler_params=pltpu.CompilerParams(
            dimension_semantics=("parallel",)),        # megacore-shard batch on v7x
        cost_estimate=cost,
    )(state, *weights)

    action = out[:B, :ACTION_DIM]
    next_state = out[:B, ACTION_DIM:PACK_W]
    return action, next_state


# ------------------------------- parameters ----------------------------------

def init_params(key):
    """PyTorch-Linear-style init; weights stored [in, out] (transposed vs torch)."""
    def linear(key, fan_in, fan_out):
        kw, kb = jax.random.split(key)
        bound = 1.0 / jnp.sqrt(fan_in)
        w = jax.random.uniform(kw, (fan_in, fan_out), jnp.float32, -bound, bound)
        b = jax.random.uniform(kb, (1, fan_out), jnp.float32, -bound, bound)
        return w, b

    keys = jax.random.split(key, 6)
    w1, b1 = linear(keys[0], STATE_DIM, HIDDEN_DIM)
    w2, b2 = linear(keys[1], HIDDEN_DIM, HIDDEN_DIM)
    w3, b3 = linear(keys[2], HIDDEN_DIM, ACTION_DIM)
    w4, b4 = linear(keys[3], STATE_DIM + ACTION_DIM, HIDDEN_DIM)
    w5, b5 = linear(keys[4], HIDDEN_DIM, HIDDEN_DIM)
    w6, b6 = linear(keys[5], HIDDEN_DIM, STATE_DIM)
    return {"w1": w1, "b1": b1, "w2": w2, "b2": b2, "w3": w3, "b3": b3,
            "w4": w4, "b4": b4, "w5": w5, "b5": b5, "w6": w6, "b6": b6}


def pack_params(params, weight_dtype=jnp.bfloat16):
    """Fuse/stack weights, pad heads into disjoint lanes of a PACK_W-wide slab,
    split the concat weight, cast weights.  Biases stay f32."""
    wd = weight_dtype
    f32 = jnp.float32

    # fused state matmul: [6, 512] = [w1 | w4_state]; bias [b1 | b4]
    w14 = jnp.concatenate([params["w1"], params["w4"][:STATE_DIM]], axis=1)
    b14 = jnp.concatenate([params["b1"], params["b4"]], axis=1)

    # stacked hidden layers (same shapes, different stages)
    w25 = jnp.stack([params["w2"], params["w5"]])                       # [2, 256, 256]
    b25 = jnp.stack([params["b2"], params["b5"]])                       # [2, 1, 256]

    # heads padded into disjoint lanes of a 9-wide slab (padding MUST stay zero)
    w3p = jnp.zeros((HIDDEN_DIM, PACK_W), f32).at[:, :ACTION_DIM].set(params["w3"])
    b3p = jnp.zeros((1, PACK_W), f32).at[:, :ACTION_DIM].set(params["b3"])
    w6p = jnp.zeros((HIDDEN_DIM, PACK_W), f32).at[:, ACTION_DIM:].set(params["w6"])
    b6p = jnp.zeros((1, PACK_W), f32).at[:, ACTION_DIM:].set(params["b6"])
    w36 = jnp.stack([w3p, w6p])                                         # [2, 256, 9]
    b36 = jnp.stack([b3p, b6p])                                         # [2, 1, 9]

    # action part of the physics-net first layer, padded to PACK_W rows (rows >= 3 zero)
    w4ap = jnp.zeros((PACK_W, HIDDEN_DIM), f32).at[:ACTION_DIM].set(params["w4"][STATE_DIM:])

    return {"w14": w14.astype(wd), "b14": b14,
            "w25": w25.astype(wd), "b25": b25,
            "w36": w36.astype(wd), "b36": b36,
            "w4ap": w4ap.astype(wd)}


# -------------------------------- references ----------------------------------

def _reference_forward(state, packed):
    """Plain-JAX reference doing the identical packed computation (same operand
    dtypes, f32 accumulation)."""
    f32 = jnp.float32
    cdt = packed["w14"].dtype
    s = state.astype(cdt)

    h14 = jnp.dot(s, packed["w14"], preferred_element_type=f32) + packed["b14"]
    h1 = jnp.maximum(h14[:, :HIDDEN_DIM], 0.0)
    h4s = h14[:, HIDDEN_DIM:]

    h2 = jnp.maximum(jnp.dot(h1.astype(cdt), packed["w25"][0],
                             preferred_element_type=f32) + packed["b25"][0], 0.0)
    a_full = jnp.tanh(jnp.dot(h2.astype(cdt), packed["w36"][0],
                              preferred_element_type=f32) + packed["b36"][0])

    h3 = jnp.maximum(h4s + jnp.dot(a_full.astype(cdt), packed["w4ap"],
                                   preferred_element_type=f32), 0.0)
    h5 = jnp.maximum(jnp.dot(h3.astype(cdt), packed["w25"][1],
                             preferred_element_type=f32) + packed["b25"][1], 0.0)
    ns_full = jnp.dot(h5.astype(cdt), packed["w36"][1],
                      preferred_element_type=f32) + packed["b36"][1]

    out = a_full + ns_full
    return out[:, :ACTION_DIM], out[:, ACTION_DIM:PACK_W]


def _torch_semantics_reference(state, params):
    """Unpacked reference matching the original PyTorch forward exactly."""
    relu = lambda x: jnp.maximum(x, 0.0)
    h = relu(state @ params["w1"] + params["b1"])
    h = relu(h @ params["w2"] + params["b2"])
    action = jnp.tanh(h @ params["w3"] + params["b3"])
    x = jnp.concatenate([state, action], axis=-1)
    h = relu(x @ params["w4"] + params["b4"])
    h = relu(h @ params["w5"] + params["b5"])
    next_state = h @ params["w6"] + params["b6"]
    return action, next_state


# ---------------------------------- main --------------------------------------

if __name__ == "__main__":
    key = jax.random.PRNGKey(0)
    pkey, skey1, skey2 = jax.random.split(key, 3)
    params = init_params(pkey)

    # --- strict correctness check: f32 weights, tiny batch (single-tile grid) ---
    packed_f32 = pack_params(params, weight_dtype=jnp.float32)
    state_small = jax.random.normal(skey1, (8, STATE_DIM), jnp.float32)
    action, next_state = physics_informed_policy_forward(state_small, packed_f32)
    jax.block_until_ready((action, next_state))
    ref_a, ref_ns = _reference_forward(state_small, packed_f32)
    torch_a, torch_ns = _torch_semantics_reference(state_small, params)
    assert action.shape == (8, ACTION_DIM)
    assert next_state.shape == (8, STATE_DIM)
    assert jnp.allclose(action, ref_a, atol=1e-4, rtol=1e-4)
    assert jnp.allclose(next_state, ref_ns, atol=1e-4, rtol=1e-4)
    assert jnp.allclose(action, torch_a, atol=2e-3, rtol=2e-3)
    assert jnp.allclose(next_state, torch_ns, atol=2e-3, rtol=2e-3)

    # --- performance path: bf16 weights (f32 accumulate), balanced 2-tile grid ---
    packed_bf16 = pack_params(params, weight_dtype=jnp.bfloat16)
    state_big = jax.random.normal(skey2, (300, STATE_DIM), jnp.float32)
    action2, next_state2 = physics_informed_policy_forward(state_big, packed_bf16)
    jax.block_until_ready((action2, next_state2))
    ref_a2, ref_ns2 = _reference_forward(state_big, packed_bf16)
    assert action2.shape == (300, ACTION_DIM)
    assert next_state2.shape == (300, STATE_DIM)
    assert jnp.allclose(action2, ref_a2, atol=2e-2, rtol=2e-2)
    assert jnp.allclose(next_state2, ref_ns2, atol=2e-2, rtol=2e-2)

    print("KERNEL_OK")
</pallas_src>

<mosaic_0001>
module attributes {stable_mosaic.version = 11 : i64} {
  func.func @_pinn_kernel(%arg0: i32, %arg1: memref<8x6xf32, #tpu.memory_space<vmem>>, %arg2: memref<6x512xf32, #tpu.memory_space<vmem>>, %arg3: memref<1x512xf32, #tpu.memory_space<vmem>>, %arg4: memref<2x256x256xf32, #tpu.memory_space<vmem>>, %arg5: memref<2x1x256xf32, #tpu.memory_space<vmem>>, %arg6: memref<2x256x9xf32, #tpu.memory_space<vmem>>, %arg7: memref<2x1x9xf32, #tpu.memory_space<vmem>>, %arg8: memref<9x256xf32, #tpu.memory_space<vmem>>, %arg9: memref<8x9xf32, #tpu.memory_space<vmem>>) attributes {dimension_semantics = [#tpu.dimension_semantics<parallel>], iteration_bounds = array<i64: 1>, scalar_prefetch = 0 : i64, scratch_operands = 0 : i64, tpu.core_type = #tpu.core_type<tc>, window_params = [{transform_indices = @transform_0, window_bounds = array<i64: 8, 6>}, {pipeline_mode = #tpu.pipeline_mode<synchronous>, transform_indices = @transform_1, window_bounds = array<i64: 6, 512>}, {pipeline_mode = #tpu.pipeline_mode<synchronous>, transform_indices = @transform_2, window_bounds = array<i64: 1, 512>}, {pipeline_mode = #tpu.pipeline_mode<synchronous>, transform_indices = @transform_3, window_bounds = array<i64: 2, 256, 256>}, {pipeline_mode = #tpu.pipeline_mode<synchronous>, transform_indices = @transform_4, window_bounds = array<i64: 2, 1, 256>}, {pipeline_mode = #tpu.pipeline_mode<synchronous>, transform_indices = @transform_5, window_bounds = array<i64: 2, 256, 9>}, {pipeline_mode = #tpu.pipeline_mode<synchronous>, transform_indices = @transform_6, window_bounds = array<i64: 2, 1, 9>}, {pipeline_mode = #tpu.pipeline_mode<synchronous>, transform_indices = @transform_7, window_bounds = array<i64: 9, 256>}, {transform_indices = @transform_8, window_bounds = array<i64: 8, 9>}]} {
    %c0 = arith.constant 0 : index
    %c0_0 = arith.constant 0 : index
    %0 = vector.load %arg1[%c0, %c0_0] : memref<8x6xf32, #tpu.memory_space<vmem>>, vector<8x6xf32>
    %c0_1 = arith.constant 0 : index
    %c0_2 = arith.constant 0 : index
    %1 = vector.load %arg2[%c0_1, %c0_2] : memref<6x512xf32, #tpu.memory_space<vmem>>, vector<6x512xf32>
    %cst = arith.constant dense<0.000000e+00> : vector<8x512xf32>
    %2 = tpu.matmul %0, %1, %cst {dimension_numbers = #tpu.dot_dimension_numbers<[1], [0], [0], [1], [0, 0, 1, 1], [], []>} : vector<8x6xf32>, vector<6x512xf32>, vector<8x512xf32> -> vector<8x512xf32>
    %c0_3 = arith.constant 0 : index
    %c0_4 = arith.constant 0 : index
    %3 = vector.load %arg3[%c0_3, %c0_4] : memref<1x512xf32, #tpu.memory_space<vmem>>, vector<1x512xf32>
    %4 = vector.broadcast %3 : vector<1x512xf32> to vector<8x512xf32>
    %5 = arith.addf %2, %4 : vector<8x512xf32>
    %6 = vector.extract_strided_slice %5 {offsets = [0, 0], sizes = [8, 256], strides = [1, 1]} : vector<8x512xf32> to vector<8x256xf32>
    %cst_5 = arith.constant 0.000000e+00 : f32
    %7 = vector.broadcast %cst_5 : f32 to vector<8x256xf32>
    %8 = arith.maximumf %6, %7 : vector<8x256xf32>
    %9 = vector.extract_strided_slice %5 {offsets = [0, 256], sizes = [8, 256], strides = [1, 1]} : vector<8x512xf32> to vector<8x256xf32>
    %c0_6 = arith.constant 0 : index
    %c0_7 = arith.constant 0 : index
    %c0_8 = arith.constant 0 : index
    %10 = vector.load %arg4[%c0_6, %c0_7, %c0_8] : memref<2x256x256xf32, #tpu.memory_space<vmem>>, vector<1x256x256xf32>
    %11 = vector.shape_cast %10 : vector<1x256x256xf32> to vector<256x256xf32>
    %cst_9 = arith.constant dense<0.000000e+00> : vector<8x256xf32>
    %12 = tpu.matmul %8, %11, %cst_9 {dimension_numbers = #tpu.dot_dimension_numbers<[1], [0], [0], [1], [0, 0, 1, 1], [], []>} : vector<8x256xf32>, vector<256x256xf32>, vector<8x256xf32> -> vector<8x256xf32>
    %c0_10 = arith.constant 0 : index
    %c0_11 = arith.constant 0 : index
    %c0_12 = arith.constant 0 : index
    %13 = vector.load %arg5[%c0_10, %c0_11, %c0_12] : memref<2x1x256xf32, #tpu.memory_space<vmem>>, vector<1x1x256xf32>
    %14 = vector.shape_cast %13 : vector<1x1x256xf32> to vector<1x256xf32>
    %15 = vector.broadcast %14 : vector<1x256xf32> to vector<8x256xf32>
    %16 = arith.addf %12, %15 : vector<8x256xf32>
    %cst_13 = arith.constant 0.000000e+00 : f32
    %17 = vector.broadcast %cst_13 : f32 to vector<8x256xf32>
    %18 = arith.maximumf %16, %17 : vector<8x256xf32>
    %c0_14 = arith.constant 0 : index
    %c0_15 = arith.constant 0 : index
    %c0_16 = arith.constant 0 : index
    %19 = vector.load %arg6[%c0_14, %c0_15, %c0_16] : memref<2x256x9xf32, #tpu.memory_space<vmem>>, vector<1x256x9xf32>
    %20 = vector.shape_cast %19 : vector<1x256x9xf32> to vector<256x9xf32>
    %cst_17 = arith.constant dense<0.000000e+00> : vector<8x9xf32>
    %21 = tpu.matmul %18, %20, %cst_17 {dimension_numbers = #tpu.dot_dimension_numbers<[1], [0], [0], [1], [0, 0, 1, 1], [], []>} : vector<8x256xf32>, vector<256x9xf32>, vector<8x9xf32> -> vector<8x9xf32>
    %c0_18 = arith.constant 0 : index
    %c0_19 = arith.constant 0 : index
    %c0_20 = arith.constant 0 : index
    %22 = vector.load %arg7[%c0_18, %c0_19, %c0_20] : memref<2x1x9xf32, #tpu.memory_space<vmem>>, vector<1x1x9xf32>
    %23 = vector.shape_cast %22 : vector<1x1x9xf32> to vector<1x9xf32>
    %24 = vector.broadcast %23 : vector<1x9xf32> to vector<8x9xf32>
    %25 = arith.addf %21, %24 : vector<8x9xf32>
    %26 = math.tanh %25 : vector<8x9xf32>
    %c0_21 = arith.constant 0 : index
    %c0_22 = arith.constant 0 : index
    %27 = vector.load %arg8[%c0_21, %c0_22] : memref<9x256xf32, #tpu.memory_space<vmem>>, vector<9x256xf32>
    %cst_23 = arith.constant dense<0.000000e+00> : vector<8x256xf32>
    %28 = tpu.matmul %26, %27, %cst_23 {dimension_numbers = #tpu.dot_dimension_numbers<[1], [0], [0], [1], [0, 0, 1, 1], [], []>} : vector<8x9xf32>, vector<9x256xf32>, vector<8x256xf32> -> vector<8x256xf32>
    %29 = arith.addf %9, %28 : vector<8x256xf32>
    %cst_24 = arith.constant 0.000000e+00 : f32
    %30 = vector.broadcast %cst_24 : f32 to vector<8x256xf32>
    %31 = arith.maximumf %29, %30 : vector<8x256xf32>
    %c1 = arith.constant 1 : index
    %c0_25 = arith.constant 0 : index
    %c0_26 = arith.constant 0 : index
    %32 = vector.load %arg4[%c1, %c0_25, %c0_26] : memref<2x256x256xf32, #tpu.memory_space<vmem>>, vector<1x256x256xf32>
    %33 = vector.shape_cast %32 : vector<1x256x256xf32> to vector<256x256xf32>
    %cst_27 = arith.constant dense<0.000000e+00> : vector<8x256xf32>
    %34 = tpu.matmul %31, %33, %cst_27 {dimension_numbers = #tpu.dot_dimension_numbers<[1], [0], [0], [1], [0, 0, 1, 1], [], []>} : vector<8x256xf32>, vector<256x256xf32>, vector<8x256xf32> -> vector<8x256xf32>
    %c1_28 = arith.constant 1 : index
    %c0_29 = arith.constant 0 : index
    %c0_30 = arith.constant 0 : index
    %35 = vector.load %arg5[%c1_28, %c0_29, %c0_30] : memref<2x1x256xf32, #tpu.memory_space<vmem>>, vector<1x1x256xf32>
    %36 = vector.shape_cast %35 : vector<1x1x256xf32> to vector<1x256xf32>
    %37 = vector.broadcast %36 : vector<1x256xf32> to vector<8x256xf32>
    %38 = arith.addf %34, %37 : vector<8x256xf32>
    %cst_31 = arith.constant 0.000000e+00 : f32
    %39 = vector.broadcast %cst_31 : f32 to vector<8x256xf32>
    %40 = arith.maximumf %38, %39 : vector<8x256xf32>
    %c1_32 = arith.constant 1 : index
    %c0_33 = arith.constant 0 : index
    %c0_34 = arith.constant 0 : index
    %41 = vector.load %arg6[%c1_32, %c0_33, %c0_34] : memref<2x256x9xf32, #tpu.memory_space<vmem>>, vector<1x256x9xf32>
    %42 = vector.shape_cast %41 : vector<1x256x9xf32> to vector<256x9xf32>
    %cst_35 = arith.constant dense<0.000000e+00> : vector<8x9xf32>
    %43 = tpu.matmul %40, %42, %cst_35 {dimension_numbers = #tpu.dot_dimension_numbers<[1], [0], [0], [1], [0, 0, 1, 1], [], []>} : vector<8x256xf32>, vector<256x9xf32>, vector<8x9xf32> -> vector<8x9xf32>
    %c1_36 = arith.constant 1 : index
    %c0_37 = arith.constant 0 : index
    %c0_38 = arith.constant 0 : index
    %44 = vector.load %arg7[%c1_36, %c0_37, %c0_38] : memref<2x1x9xf32, #tpu.memory_space<vmem>>, vector<1x1x9xf32>
    %45 = vector.shape_cast %44 : vector<1x1x9xf32> to vector<1x9xf32>
    %46 = vector.broadcast %45 : vector<1x9xf32> to vector<8x9xf32>
    %47 = arith.addf %43, %46 : vector<8x9xf32>
    %48 = arith.addf %26, %47 : vector<8x9xf32>
    %c0_39 = arith.constant 0 : index
    %c0_40 = arith.constant 0 : index
    %49 = vector.load %arg9[%c0_39, %c0_40] : memref<8x9xf32, #tpu.memory_space<vmem>>, vector<8x9xf32>
    tpu.vector_store %arg9[%c0_39, %c0_40], %48 {strides = array<i32>} : memref<8x9xf32, #tpu.memory_space<vmem>>, vector<8x9xf32>,
    return
  }
  func.func @transform_0(%arg0: i32) -> (i32, i32) {
    %c0_i32 = arith.constant 0 : i32
    %c0_i32_0 = arith.constant 0 : i32
    return %arg0, %c0_i32 : i32, i32
  }
  func.func @transform_1(%arg0: i32) -> (i32, i32) {
    %c0_i32 = arith.constant 0 : i32
    %c0_i32_0 = arith.constant 0 : i32
    %c0_i32_1 = arith.constant 0 : i32
    return %c0_i32, %c0_i32_0 : i32, i32
  }
  func.func @transform_2(%arg0: i32) -> (i32, i32) {
    %c0_i32 = arith.constant 0 : i32
    %c0_i32_0 = arith.constant 0 : i32
    %c0_i32_1 = arith.constant 0 : i32
    return %c0_i32, %c0_i32_0 : i32, i32
  }
  func.func @transform_3(%arg0: i32) -> (i32, i32, i32) {
    %c0_i32 = arith.constant 0 : i32
    %c0_i32_0 = arith.constant 0 : i32
    %c0_i32_1 = arith.constant 0 : i32
    %c0_i32_2 = arith.constant 0 : i32
    return %c0_i32, %c0_i32_0, %c0_i32_1 : i32, i32, i32
  }
  func.func @transform_4(%arg0: i32) -> (i32, i32, i32) {
    %c0_i32 = arith.constant 0 : i32
    %c0_i32_0 = arith.constant 0 : i32
    %c0_i32_1 = arith.constant 0 : i32
    %c0_i32_2 = arith.constant 0 : i32
    return %c0_i32, %c0_i32_0, %c0_i32_1 : i32, i32, i32
  }
  func.func @transform_5(%arg0: i32) -> (i32, i32, i32) {
    %c0_i32 = arith.constant 0 : i32
    %c0_i32_0 = arith.constant 0 : i32
    %c0_i32_1 = arith.constant 0 : i32
    %c0_i32_2 = arith.constant 0 : i32
    return %c0_i32, %c0_i32_0, %c0_i32_1 : i32, i32, i32
  }
  func.func @transform_6(%arg0: i32) -> (i32, i32, i32) {
    %c0_i32 = arith.constant 0 : i32
    %c0_i32_0 = arith.constant 0 : i32
    %c0_i32_1 = arith.constant 0 : i32
    %c0_i32_2 = arith.constant 0 : i32
    return %c0_i32, %c0_i32_0, %c0_i32_1 : i32, i32, i32
  }
  func.func @transform_7(%arg0: i32) -> (i32, i32) {
    %c0_i32 = arith.constant 0 : i32
    %c0_i32_0 = arith.constant 0 : i32
    %c0_i32_1 = arith.constant 0 : i32
    return %c0_i32, %c0_i32_0 : i32, i32
  }
  func.func @transform_8(%arg0: i32) -> (i32, i32) {
    %c0_i32 = arith.constant 0 : i32
    %c0_i32_0 = arith.constant 0 : i32
    return %arg0, %c0_i32 : i32, i32
  }
}

</mosaic_0001>

<llo_original>
// kernel: physics_informed_policy_forward.1
$region0: #{physics_informed_policy_forward.1}
  #allocation0 [shape = 'u32[]', space=smem, size = 0x4, offset = 0x4, fixed_abs, tag = 'smem constant byte address 0x4 - core index']
  #allocation1 [shape = 'u32[144,128]{1,0:T(1,128)}', space=vmem, size = 0x12000, scoped, tag = 'internal scratch']
  %s0 = inlined_call_operand.vmem [shape: f32[8,6], index: 0, kind: input, shape index: {}]
  %s1 = inlined_call_operand.vmem [shape: f32[6,512], index: 1, kind: input, shape index: {}]
  %s2 = inlined_call_operand.vmem [shape: f32[1,512], index: 2, kind: input, shape index: {}]
  %s3 = inlined_call_operand.hbm [shape: f32[2,256,256], index: 3, kind: input, shape index: {}]
  %s4 = inlined_call_operand.vmem [shape: f32[2,1,256], index: 4, kind: input, shape index: {}]
  %s5 = inlined_call_operand.vmem [shape: f32[2,256,9], index: 5, kind: input, shape index: {}]
  %s6 = inlined_call_operand.vmem [shape: f32[2,1,9], index: 6, kind: input, shape index: {}]
  %s7 = inlined_call_operand.vmem [shape: f32[9,256], index: 7, kind: input, shape index: {}]
  %s8 = inlined_call_operand.vmem [shape: f32[8,9], index: 8, kind: output, shape index: {}]
  %s9 = sld [smem:[#allocation0]]
  $region46: #{physics_informed_policy_forward.1} parent=0
    _
  %s11 = ssub.s32 1, %s9
  %s12 = scalar_select 0, %s11, %s9
  $region1: #{physics_informed_policy_forward.1} parent=0
    #allocation2 [shape = 'u8[524288]{0}', space=vmem, size = 0x80000, scoped, tag = 'input window, operand 3, single buffered']
    #allocation3 [shape = 's32[1]{0}', space=sflag, size = 0x4, scoped, tag = 'scoped memory for physics_informed_policy_forward.1']
    %13 = vsyncpa [#allocation3], 0
    // Predicated region
    $region2: #{physics_informed_policy_forward.1} parent=1 // pred_check
      _
    $region3: #{physics_informed_policy_forward.1} parent=1 // pred_check_branch
      %15 = sbr.rel (0) target = $region5
    $region4: #{physics_informed_policy_forward.1} parent=1 // pred_region
      _
    $region5: #{physics_informed_policy_forward.1} parent=1 // pred_fallthru
      _
    // Predicated region
    $region6: #{physics_informed_policy_forward.1} parent=1 // pred_check
      _
    $region7: #{physics_informed_policy_forward.1} parent=1 // pred_check_branch
      %17 = sbr.rel (0) target = $region9
    $region8: #{physics_informed_policy_forward.1} parent=1 // pred_region
      _
    $region9: #{physics_informed_policy_forward.1} parent=1 // pred_fallthru
      _
    // Predicated region
    $region10: #{physics_informed_policy_forward.1} parent=1 // pred_check
      _
    $region11: #{physics_informed_policy_forward.1} parent=1 // pred_check_branch
      %19 = sbr.rel (0) target = $region13
    $region12: #{physics_informed_policy_forward.1} parent=1 // pred_region
      _
    $region13: #{physics_informed_policy_forward.1} parent=1 // pred_fallthru
      _
    // Predicated region
    $region14: #{physics_informed_policy_forward.1} parent=1 // pred_check
      _
    $region15: #{physics_informed_policy_forward.1} parent=1 // pred_check_branch
      %21 = sbr.rel (0) target = $region17
    $region16: #{physics_informed_policy_forward.1} parent=1 // pred_region
      %s23 = ssub.s32 16384, 16384
      %24 = vsyncadd [#allocation3], %s23
      %s25 = sshll.u32 [#allocation2], 4
      %s26 = int_to_ptr.vmem [resolvable:$true] %s25
      %31 = dma.hbm_to_vmem [thread:$0]  %s3, 16384, %s26, [#allocation3], 256, 256, 16
    $region17: #{physics_informed_policy_forward.1} parent=1 // pred_fallthru
      _
    // Predicated region
    $region18: #{physics_informed_policy_forward.1} parent=1 // pred_check
      _
    $region19: #{physics_informed_policy_forward.1} parent=1 // pred_check_branch
      %33 = sbr.rel (0) target = $region21
    $region20: #{physics_informed_policy_forward.1} parent=1 // pred_region
      _
    $region21: #{physics_informed_policy_forward.1} parent=1 // pred_fallthru
      _
    // Predicated region
    $region22: #{physics_informed_policy_forward.1} parent=1 // pred_check
      _
    $region23: #{physics_informed_policy_forward.1} parent=1 // pred_check_branch
      %35 = sbr.rel (0) target = $region25
    $region24: #{physics_informed_policy_forward.1} parent=1 // pred_region
      _
    $region25: #{physics_informed_policy_forward.1} parent=1 // pred_fallthru
      _
    // Predicated region
    $region26: #{physics_informed_policy_forward.1} parent=1 // pred_check
      _
    $region27: #{physics_informed_policy_forward.1} parent=1 // pred_check_branch
      %37 = sbr.rel (0) target = $region29
    $region28: #{physics_informed_policy_forward.1} parent=1 // pred_region
      _
    $region29: #{physics_informed_policy_forward.1} parent=1 // pred_fallthru
      _
    // Predicated region
    $region30: #{physics_informed_policy_forward.1} parent=1 // pred_check
      _
    $region31: #{physics_informed_policy_forward.1} parent=1 // pred_check_branch
      %39 = sbr.rel (0) target = $region33
    $region32: #{physics_informed_policy_forward.1} parent=1 // pred_region
      _
    $region33: #{physics_informed_policy_forward.1} parent=1 // pred_fallthru
      _
    // Predicated region
    $region34: #{physics_informed_policy_forward.1} parent=1 // pred_check
      _
    $region35: #{physics_informed_policy_forward.1} parent=1 // pred_check_branch
      %41 = sbr.rel (0) target = $region37
    $region36: #{physics_informed_policy_forward.1} parent=1 // pred_region
      %42 = dma.done [#allocation3], 16384
    $region37: #{physics_informed_policy_forward.1} parent=1 // pred_fallthru
      _
    %v43 = vld [vmem:[%s0] sm:$0xff]
    %v44 = vld [vmem:[%s1] sm:$0x3f]
    %v45 = vld [vmem:[%s1 + $0x8] sm:$0x3f]
    %v46 = vld [vmem:[%s1 + $0x10] sm:$0x3f]
    %v47 = vld [vmem:[%s1 + $0x18] sm:$0x3f]
    %v48 = vld [vmem:[%s2] sm:$0xf]
    %v50 = vlaneseq
    %v51 = vshrl.u32 %v50, 7
    %v52 = vsub.s32 0, %v51
    %v53 = vrot.slane %v48, %v52
    %v54 = vlaneseq
    %v55 = vshrl.u32 %v54, 7
    %v56 = vsub.s32 1, %v55
    %v57 = vrot.slane %v48, %v56
    %v58 = vlaneseq
    %v59 = vshrl.u32 %v58, 7
    %v60 = vsub.s32 2, %v59
    %v61 = vrot.slane %v48, %v60
    %v62 = vlaneseq
    %v63 = vshrl.u32 %v62, 7
    %v64 = vsub.s32 3, %v63
    %v65 = vrot.slane %v48, %v64
    %vm70 = vcmask 48128
    %v72 = vsel %vm70, %v43, 0
    %vm74 = vcmask 1045504
    %v76 = vsel %vm74, %v44, 0
    %v79 = vsel %vm74, %v45, 0
    %v82 = vsel %vm74, %v46, 0
    %v85 = vsel %vm74, %v47, 0
    %87 = vmatprep.subr.mxu0 %v79
    %88 = vmatpush1.msra.mxu0 %v76
    %89 = vmatprep.subr.mxu0 0.0
    %90 = vmatpush1.msra.mxu0 0.0
    %91 = vmatprep.subr.mxu0 0.0
    %92 = vmatpush1.msra.mxu0 0.0
    %93 = vmatprep.subr.mxu0 0.0
    %94 = vmatpush1.msra.mxu0 0.0
    %95 = vmatprep.subr.mxu0 0.0
    %96 = vmatpush1.msra.mxu0 0.0
    %97 = vmatprep.subr.mxu0 0.0
    %98 = vmatpush1.msra.mxu0 0.0
    %99 = vmatprep.subr.mxu0 0.0
    %100 = vmatpush1.msra.mxu0 0.0
    %101 = vmatprep.subr.mxu0 0.0
    %102 = vmatpush1.msra.mxu0 0.0
    %103 = vmatprep.subr.mxu0 0.0
    %104 = vmatpush1.msra.mxu0 0.0
    %105 = vmatprep.subr.mxu0 0.0
    %106 = vmatpush1.msra.mxu0 0.0
    %107 = vmatprep.subr.mxu0 0.0
    %108 = vmatpush1.msra.mxu0 0.0
    %109 = vmatprep.subr.mxu0 0.0
    %110 = vmatpush1.msra.mxu0 0.0
    %111 = vmatprep.subr.mxu0 0.0
    %112 = vmatpush1.msra.mxu0 0.0
    %113 = vmatprep.subr.mxu0 0.0
    %114 = vmatpush1.msra.mxu0 0.0
    %115 = vmatprep.subr.mxu0 0.0
    %116 = vmatpush1.msra.mxu0 0.0
    %117 = vmatprep.subr.mxu0 0.0
    %118 = vmatpush1.msra.mxu0 0.0
    %119 = vmatprep.subr.mxu0 0.0
    %120 = vmatpush1.msra.mxu0 0.0
    %121 = vmatprep.subr.mxu0 0.0
    %122 = vmatpush1.msra.mxu0 0.0
    %123 = vmatprep.subr.mxu0 0.0
    %124 = vmatpush1.msra.mxu0 0.0
    %125 = vmatprep.subr.mxu0 0.0
    %126 = vmatpush1.msra.mxu0 0.0
    %127 = vmatprep.subr.mxu0 0.0
    %128 = vmatpush1.msra.mxu0 0.0
    %129 = vmatprep.subr.mxu0 0.0
    %130 = vmatpush1.msra.mxu0 0.0
    %131 = vmatprep.subr.mxu0 0.0
    %132 = vmatpush1.msra.mxu0 0.0
    %133 = vmatprep.subr.mxu0 0.0
    %134 = vmatpush1.msra.mxu0 0.0
    %135 = vmatprep.subr.mxu0 0.0
    %136 = vmatpush1.msra.mxu0 0.0
    %137 = vmatprep.subr.mxu0 0.0
    %138 = vmatpush1.msra.mxu0 0.0
    %139 = vmatprep.subr.mxu0 0.0
    %140 = vmatpush1.msra.mxu0 0.0
    %141 = vmatprep.subr.mxu0 0.0
    %142 = vmatpush1.msra.mxu0 0.0
    %143 = vmatprep.subr.mxu0 0.0
    %144 = vmatpush1.msra.mxu0 0.0
    %145 = vmatprep.subr.mxu0 0.0
    %146 = vmatpush1.msra.mxu0 0.0
    %147 = vmatprep.subr.mxu0 0.0
    %148 = vmatpush1.msra.mxu0 0.0
    %149 = vmatprep.subr.mxu0 0.0
    %150 = vmatpush1.msra.mxu0 0.0
    %151 = vmatprep.mubr.f32.mxu0 0.0
    %152 = vmatmul.mubr.f32.gmra.mrb[0].mxu0 %v72
    %v153 = vpop.f32.mrb[0].mxu0
    %v154 = vadd.f32 %v53, %v153
    %v155 = vpop.f32.mrb[0].mxu0
    %v156 = vadd.f32 %v57, %v155
    %157 = vdwg.mxu0
    %158 = vmatprep.subr.mxu0 %v85
    %159 = vmatpush1.msra.mxu0 %v82
    %160 = vmatprep.subr.mxu0 0.0
    %161 = vmatpush1.msra.mxu0 0.0
    %162 = vmatprep.subr.mxu0 0.0
    %163 = vmatpush1.msra.mxu0 0.0
    %164 = vmatprep.subr.mxu0 0.0
    %165 = vmatpush1.msra.mxu0 0.0
    %166 = vmatprep.subr.mxu0 0.0
    %167 = vmatpush1.msra.mxu0 0.0
    %168 = vmatprep.subr.mxu0 0.0
    %169 = vmatpush1.msra.mxu0 0.0
    %170 = vmatprep.subr.mxu0 0.0
    %171 = vmatpush1.msra.mxu0 0.0
    %172 = vmatprep.subr.mxu0 0.0
    %173 = vmatpush1.msra.mxu0 0.0
    %174 = vmatprep.subr.mxu0 0.0
    %175 = vmatpush1.msra.mxu0 0.0
    %176 = vmatprep.subr.mxu0 0.0
    %177 = vmatpush1.msra.mxu0 0.0
    %178 = vmatprep.subr.mxu0 0.0
    %179 = vmatpush1.msra.mxu0 0.0
    %180 = vmatprep.subr.mxu0 0.0
    %181 = vmatpush1.msra.mxu0 0.0
    %182 = vmatprep.subr.mxu0 0.0
    %183 = vmatpush1.msra.mxu0 0.0
    %184 = vmatprep.subr.mxu0 0.0
    %185 = vmatpush1.msra.mxu0 0.0
    %186 = vmatprep.subr.mxu0 0.0
    %187 = vmatpush1.msra.mxu0 0.0
    %188 = vmatprep.subr.mxu0 0.0
    %189 = vmatpush1.msra.mxu0 0.0
    %190 = vmatprep.subr.mxu0 0.0
    %191 = vmatpush1.msra.mxu0 0.0
    %192 = vmatprep.subr.mxu0 0.0
    %193 = vmatpush1.msra.mxu0 0.0
    %194 = vmatprep.subr.mxu0 0.0
    %195 = vmatpush1.msra.mxu0 0.0
    %196 = vmatprep.subr.mxu0 0.0
    %197 = vmatpush1.msra.mxu0 0.0
    %198 = vmatprep.subr.mxu0 0.0
    %199 = vmatpush1.msra.mxu0 0.0
    %200 = vmatprep.subr.mxu0 0.0
    %201 = vmatpush1.msra.mxu0 0.0
    %202 = vmatprep.subr.mxu0 0.0
    %203 = vmatpush1.msra.mxu0 0.0
    %204 = vmatprep.subr.mxu0 0.0
    %205 = vmatpush1.msra.mxu0 0.0
    %206 = vmatprep.subr.mxu0 0.0
    %207 = vmatpush1.msra.mxu0 0.0
    %208 = vmatprep.subr.mxu0 0.0
    %209 = vmatpush1.msra.mxu0 0.0
    %210 = vmatprep.subr.mxu0 0.0
    %211 = vmatpush1.msra.mxu0 0.0
    %212 = vmatprep.subr.mxu0 0.0
    %213 = vmatpush1.msra.mxu0 0.0
    %214 = vmatprep.subr.mxu0 0.0
    %215 = vmatpush1.msra.mxu0 0.0
    %216 = vmatprep.subr.mxu0 0.0
    %217 = vmatpush1.msra.mxu0 0.0
    %218 = vmatprep.subr.mxu0 0.0
    %219 = vmatpush1.msra.mxu0 0.0
    %220 = vmatprep.subr.mxu0 0.0
    %221 = vmatpush1.msra.mxu0 0.0
    %222 = vmatprep.mubr.f32.mxu0 0.0
    %223 = vmatmul.mubr.f32.gmra.mrb[0].mxu0 %v72
    %v224 = vpop.f32.mrb[0].mxu0
    %v225 = vadd.f32 %v61, %v224
    %v226 = vpop.f32.mrb[0].mxu0
    %v227 = vadd.f32 %v65, %v226
    %228 = vdwg.mxu0
    %v229 = vmax.f32 %v154, 0.0
    %v230 = vmax.f32 %v156, 0.0
    %v231 = vld [vmem:[#allocation2] sm:$0xff]
    %v232 = vld [vmem:[#allocation2 + $0x8] sm:$0xff]
    %v233 = vld [vmem:[#allocation2 + $0x10] sm:$0xff]
    %v234 = vld [vmem:[#allocation2 + $0x18] sm:$0xff]
    %v235 = vld [vmem:[#allocation2 + $0x20] sm:$0xff]
    %v236 = vld [vmem:[#allocation2 + $0x28] sm:$0xff]
    %v237 = vld [vmem:[#allocation2 + $0x30] sm:$0xff]
    %v238 = vld [vmem:[#allocation2 + $0x38] sm:$0xff]
    %v239 = vld [vmem:[#allocation2 + $0x40] sm:$0xff]
    %v240 = vld [vmem:[#allocation2 + $0x48] sm:$0xff]
    %v241 = vld [vmem:[#allocation2 + $0x50] sm:$0xff]
    %v242 = vld [vmem:[#allocation2 + $0x58] sm:$0xff]
    %v243 = vld [vmem:[#allocation2 + $0x60] sm:$0xff]
    %v244 = vld [vmem:[#allocation2 + $0x68] sm:$0xff]
    %v245 = vld [vmem:[#allocation2 + $0x70] sm:$0xff]
    %v246 = vld [vmem:[#allocation2 + $0x78] sm:$0xff]
    %v247 = vld [vmem:[#allocation2 + $0x80] sm:$0xff]
    %v248 = vld [vmem:[#allocation2 + $0x88] sm:$0xff]
    %v249 = vld [vmem:[#allocation2 + $0x90] sm:$0xff]
    %v250 = vld [vmem:[#allocation2 + $0x98] sm:$0xff]
    %v251 = vld [vmem:[#allocation2 + $0xa0] sm:$0xff]
    %v252 = vld [vmem:[#allocation2 + $0xa8] sm:$0xff]
    %v253 = vld [vmem:[#allocation2 + $0xb0] sm:$0xff]
    %v254 = vld [vmem:[#allocation2 + $0xb8] sm:$0xff]
    %v255 = vld [vmem:[#allocation2 + $0xc0] sm:$0xff]
    %v256 = vld [vmem:[#allocation2 + $0xc8] sm:$0xff]
    %v257 = vld [vmem:[#allocation2 + $0xd0] sm:$0xff]
    %v258 = vld [vmem:[#allocation2 + $0xd8] sm:$0xff]
    %v259 = vld [vmem:[#allocation2 + $0xe0] sm:$0xff]
    %v260 = vld [vmem:[#allocation2 + $0xe8] sm:$0xff]
    %v261 = vld [vmem:[#allocation2 + $0xf0] sm:$0xff]
    %v262 = vld [vmem:[#allocation2 + $0xf8] sm:$0xff]
    %v263 = vld [vmem:[#allocation2 + $0x100] sm:$0xff]
    %v264 = vld [vmem:[#allocation2 + $0x108] sm:$0xff]
    %v265 = vld [vmem:[#allocation2 + $0x110] sm:$0xff]
    %v266 = vld [vmem:[#allocation2 + $0x118] sm:$0xff]
    %v267 = vld [vmem:[#allocation2 + $0x120] sm:$0xff]
    %v268 = vld [vmem:[#allocation2 + $0x128] sm:$0xff]
    %v269 = vld [vmem:[#allocation2 + $0x130] sm:$0xff]
    %v270 = vld [vmem:[#allocation2 + $0x138] sm:$0xff]
    %v271 = vld [vmem:[#allocation2 + $0x140] sm:$0xff]
    %v272 = vld [vmem:[#allocation2 + $0x148] sm:$0xff]
    %v273 = vld [vmem:[#allocation2 + $0x150] sm:$0xff]
    %v274 = vld [vmem:[#allocation2 + $0x158] sm:$0xff]
    %v275 = vld [vmem:[#allocation2 + $0x160] sm:$0xff]
    %v276 = vld [vmem:[#allocation2 + $0x168] sm:$0xff]
    %v277 = vld [vmem:[#allocation2 + $0x170] sm:$0xff]
    %v278 = vld [vmem:[#allocation2 + $0x178] sm:$0xff]
    %v279 = vld [vmem:[#allocation2 + $0x180] sm:$0xff]
    %v280 = vld [vmem:[#allocation2 + $0x188] sm:$0xff]
    %v281 = vld [vmem:[#allocation2 + $0x190] sm:$0xff]
    %v282 = vld [vmem:[#allocation2 + $0x198] sm:$0xff]
    %v283 = vld [vmem:[#allocation2 + $0x1a0] sm:$0xff]
    %v284 = vld [vmem:[#allocation2 + $0x1a8] sm:$0xff]
    %v285 = vld [vmem:[#allocation2 + $0x1b0] sm:$0xff]
    %v286 = vld [vmem:[#allocation2 + $0x1b8] sm:$0xff]
    %v287 = vld [vmem:[#allocation2 + $0x1c0] sm:$0xff]
    %v288 = vld [vmem:[#allocation2 + $0x1c8] sm:$0xff]
    %v289 = vld [vmem:[#allocation2 + $0x1d0] sm:$0xff]
    %v290 = vld [vmem:[#allocation2 + $0x1d8] sm:$0xff]
    %v291 = vld [vmem:[#allocation2 + $0x1e0] sm:$0xff]
    %v292 = vld [vmem:[#allocation2 + $0x1e8] sm:$0xff]
    %v293 = vld [vmem:[#allocation2 + $0x1f0] sm:$0xff]
    %v294 = vld [vmem:[#allocation2 + $0x1f8] sm:$0xff]
    %v295 = vld [vmem:[%s4] sm:$0x3]
    %v297 = vlaneseq
    %v298 = vshrl.u32 %v297, 7
    %v299 = vsub.s32 0, %v298
    %v300 = vrot.slane %v295, %v299
    %v301 = vlaneseq
    %v302 = vshrl.u32 %v301, 7
    %v303 = vsub.s32 1, %v302
    %v304 = vrot.slane %v295, %v303
    %307 = vmatprep.subr.mxu0 %v232
    %308 = vmatpush1.msra.mxu0 %v231
    %309 = vmatprep.subr.mxu0 %v234
    %310 = vmatpush1.msra.mxu0 %v233
    %311 = vmatprep.subr.mxu0 %v236
    %312 = vmatpush1.msra.mxu0 %v235
    %313 = vmatprep.subr.mxu0 %v238
    %314 = vmatpush1.msra.mxu0 %v237
    %315 = vmatprep.subr.mxu0 %v240
    %316 = vmatpush1.msra.mxu0 %v239
    %317 = vmatprep.subr.mxu0 %v242
    %318 = vmatpush1.msra.mxu0 %v241
    %319 = vmatprep.subr.mxu0 %v244
    %320 = vmatpush1.msra.mxu0 %v243
    %321 = vmatprep.subr.mxu0 %v246
    %322 = vmatpush1.msra.mxu0 %v245
    %323 = vmatprep.subr.mxu0 %v248
    %324 = vmatpush1.msra.mxu0 %v247
    %325 = vmatprep.subr.mxu0 %v250
    %326 = vmatpush1.msra.mxu0 %v249
    %327 = vmatprep.subr.mxu0 %v252
    %328 = vmatpush1.msra.mxu0 %v251
    %329 = vmatprep.subr.mxu0 %v254
    %330 = vmatpush1.msra.mxu0 %v253
    %331 = vmatprep.subr.mxu0 %v256
    %332 = vmatpush1.msra.mxu0 %v255
    %333 = vmatprep.subr.mxu0 %v258
    %334 = vmatpush1.msra.mxu0 %v257
    %335 = vmatprep.subr.mxu0 %v260
    %336 = vmatpush1.msra.mxu0 %v259
    %337 = vmatprep.subr.mxu0 %v262
    %338 = vmatpush1.msra.mxu0 %v261
    %339 = vmatprep.subr.mxu0 %v264
    %340 = vmatpush1.msra.mxu0 %v263
    %341 = vmatprep.subr.mxu0 %v266
    %342 = vmatpush1.msra.mxu0 %v265
    %343 = vmatprep.subr.mxu0 %v268
    %344 = vmatpush1.msra.mxu0 %v267
    %345 = vmatprep.subr.mxu0 %v270
    %346 = vmatpush1.msra.mxu0 %v269
    %347 = vmatprep.subr.mxu0 %v272
    %348 = vmatpush1.msra.mxu0 %v271
    %349 = vmatprep.subr.mxu0 %v274
    %350 = vmatpush1.msra.mxu0 %v273
    %351 = vmatprep.subr.mxu0 %v276
    %352 = vmatpush1.msra.mxu0 %v275
    %353 = vmatprep.subr.mxu0 %v278
    %354 = vmatpush1.msra.mxu0 %v277
    %355 = vmatprep.subr.mxu0 %v280
    %356 = vmatpush1.msra.mxu0 %v279
    %357 = vmatprep.subr.mxu0 %v282
    %358 = vmatpush1.msra.mxu0 %v281
    %359 = vmatprep.subr.mxu0 %v284
    %360 = vmatpush1.msra.mxu0 %v283
    %361 = vmatprep.subr.mxu0 %v286
    %362 = vmatpush1.msra.mxu0 %v285
    %363 = vmatprep.subr.mxu0 %v288
    %364 = vmatpush1.msra.mxu0 %v287
    %365 = vmatprep.subr.mxu0 %v290
    %366 = vmatpush1.msra.mxu0 %v289
    %367 = vmatprep.subr.mxu0 %v292
    %368 = vmatpush1.msra.mxu0 %v291
    %369 = vmatprep.subr.mxu0 %v294
    %370 = vmatpush1.msra.mxu0 %v293
    %371 = vmatprep.mubr.f32.mxu0 %v230
    %372 = vmatmul.mubr.f32.gmra.mrb[0].mxu0 %v229
    %v373 = vpop.f32.mrb[0].mxu0
    %v374 = vadd.f32 %v300, %v373
    %v375 = vpop.f32.mrb[0].mxu0
    %v376 = vadd.f32 %v304, %v375
    %377 = vdwg.mxu0
    %v378 = vmax.f32 %v374, 0.0
    %v379 = vmax.f32 %v376, 0.0
    %v380 = vld [vmem:[%s5] sm:$0xff]
    %v381 = vld [vmem:[%s5 + $0x8] sm:$0xff]
    %v382 = vld [vmem:[%s5 + $0x10] sm:$0xff]
    %v383 = vld [vmem:[%s5 + $0x18] sm:$0xff]
    %v384 = vld [vmem:[%s5 + $0x20] sm:$0xff]
    %v385 = vld [vmem:[%s5 + $0x28] sm:$0xff]
    %v386 = vld [vmem:[%s5 + $0x30] sm:$0xff]
    %v387 = vld [vmem:[%s5 + $0x38] sm:$0xff]
    %v388 = vld [vmem:[%s5 + $0x40] sm:$0xff]
    %v389 = vld [vmem:[%s5 + $0x48] sm:$0xff]
    %v390 = vld [vmem:[%s5 + $0x50] sm:$0xff]
    %v391 = vld [vmem:[%s5 + $0x58] sm:$0xff]
    %v392 = vld [vmem:[%s5 + $0x60] sm:$0xff]
    %v393 = vld [vmem:[%s5 + $0x68] sm:$0xff]
    %v394 = vld [vmem:[%s5 + $0x70] sm:$0xff]
    %v395 = vld [vmem:[%s5 + $0x78] sm:$0xff]
    %v396 = vld [vmem:[%s5 + $0x80] sm:$0xff]
    %v397 = vld [vmem:[%s5 + $0x88] sm:$0xff]
    %v398 = vld [vmem:[%s5 + $0x90] sm:$0xff]
    %v399 = vld [vmem:[%s5 + $0x98] sm:$0xff]
    %v400 = vld [vmem:[%s5 + $0xa0] sm:$0xff]
    %v401 = vld [vmem:[%s5 + $0xa8] sm:$0xff]
    %v402 = vld [vmem:[%s5 + $0xb0] sm:$0xff]
    %v403 = vld [vmem:[%s5 + $0xb8] sm:$0xff]
    %v404 = vld [vmem:[%s5 + $0xc0] sm:$0xff]
    %v405 = vld [vmem:[%s5 + $0xc8] sm:$0xff]
    %v406 = vld [vmem:[%s5 + $0xd0] sm:$0xff]
    %v407 = vld [vmem:[%s5 + $0xd8] sm:$0xff]
    %v408 = vld [vmem:[%s5 + $0xe0] sm:$0xff]
    %v409 = vld [vmem:[%s5 + $0xe8] sm:$0xff]
    %v410 = vld [vmem:[%s5 + $0xf0] sm:$0xff]
    %v411 = vld [vmem:[%s5 + $0xf8] sm:$0xff]
    %v412 = vld [vmem:[%s6] sm:$0x1]
    %v414 = vlaneseq
    %v415 = vshrl.u32 %v414, 7
    %v416 = vsub.s32 0, %v415
    %v417 = vrot.slane %v412, %v416
    %419 = vmatprep.subr.mxu0 0.0
    %420 = vmatpush1.msra.mxu0 %v380
    %421 = vmatprep.subr.mxu0 0.0
    %422 = vmatpush1.msra.mxu0 %v381
    %423 = vmatprep.subr.mxu0 0.0
    %424 = vmatpush1.msra.mxu0 %v382
    %425 = vmatprep.subr.mxu0 0.0
    %426 = vmatpush1.msra.mxu0 %v383
    %427 = vmatprep.subr.mxu0 0.0
    %428 = vmatpush1.msra.mxu0 %v384
    %429 = vmatprep.subr.mxu0 0.0
    %430 = vmatpush1.msra.mxu0 %v385
    %431 = vmatprep.subr.mxu0 0.0
    %432 = vmatpush1.msra.mxu0 %v386
    %433 = vmatprep.subr.mxu0 0.0
    %434 = vmatpush1.msra.mxu0 %v387
    %435 = vmatprep.subr.mxu0 0.0
    %436 = vmatpush1.msra.mxu0 %v388
    %437 = vmatprep.subr.mxu0 0.0
    %438 = vmatpush1.msra.mxu0 %v389
    %439 = vmatprep.subr.mxu0 0.0
    %440 = vmatpush1.msra.mxu0 %v390
    %441 = vmatprep.subr.mxu0 0.0
    %442 = vmatpush1.msra.mxu0 %v391
    %443 = vmatprep.subr.mxu0 0.0
    %444 = vmatpush1.msra.mxu0 %v392
    %445 = vmatprep.subr.mxu0 0.0
    %446 = vmatpush1.msra.mxu0 %v393
    %447 = vmatprep.subr.mxu0 0.0
    %448 = vmatpush1.msra.mxu0 %v394
    %449 = vmatprep.subr.mxu0 0.0
    %450 = vmatpush1.msra.mxu0 %v395
    %451 = vmatprep.subr.mxu0 0.0
    %452 = vmatpush1.msra.mxu0 %v396
    %453 = vmatprep.subr.mxu0 0.0
    %454 = vmatpush1.msra.mxu0 %v397
    %455 = vmatprep.subr.mxu0 0.0
    %456 = vmatpush1.msra.mxu0 %v398
    %457 = vmatprep.subr.mxu0 0.0
    %458 = vmatpush1.msra.mxu0 %v399
    %459 = vmatprep.subr.mxu0 0.0
    %460 = vmatpush1.msra.mxu0 %v400
    %461 = vmatprep.subr.mxu0 0.0
    %462 = vmatpush1.msra.mxu0 %v401
    %463 = vmatprep.subr.mxu0 0.0
    %464 = vmatpush1.msra.mxu0 %v402
    %465 = vmatprep.subr.mxu0 0.0
    %466 = vmatpush1.msra.mxu0 %v403
    %467 = vmatprep.subr.mxu0 0.0
    %468 = vmatpush1.msra.mxu0 %v404
    %469 = vmatprep.subr.mxu0 0.0
    %470 = vmatpush1.msra.mxu0 %v405
    %471 = vmatprep.subr.mxu0 0.0
    %472 = vmatpush1.msra.mxu0 %v406
    %473 = vmatprep.subr.mxu0 0.0
    %474 = vmatpush1.msra.mxu0 %v407
    %475 = vmatprep.subr.mxu0 0.0
    %476 = vmatpush1.msra.mxu0 %v408
    %477 = vmatprep.subr.mxu0 0.0
    %478 = vmatpush1.msra.mxu0 %v409
    %479 = vmatprep.subr.mxu0 0.0
    %480 = vmatpush1.msra.mxu0 %v410
    %481 = vmatprep.subr.mxu0 0.0
    %482 = vmatpush1.msra.mxu0 %v411
    %483 = vmatprep.mubr.f32.mxu0 %v379
    %484 = vmatmul.mubr.f32.gmra.mrb[0].mxu0 %v378
    %v485 = vpop.f32.mrb[0].mxu0
    %v486 = vadd.f32 %v417, %v485
    %v487 = vpop.f32.mrb[0].mxu0
    %488 = vdwg.mxu0
    %v489 = vtanh.pop %v486
    %v490 = vld [vmem:[%s7] sm:$0xff]
    %v491 = vld [vmem:[%s7 + $0x8] sm:$0xff]
    %v492 = vld [vmem:[%s7 + $0x10] sm:$0x1]
    %v493 = vld [vmem:[%s7 + $0x18] sm:$0x1]
    %vm494 = vcmask 72704
    %v496 = vsel %vm494, %v489, 0
    %vm498 = vcmask 1040384
    %v500 = vsel %vm498, %v492, 0
    %v503 = vsel %vm498, %v493, 0
    %505 = vmatprep.subr.mxu0 %v491
    %506 = vmatpush1.msra.mxu0 %v490
    %507 = vmatprep.subr.mxu0 %v503
    %508 = vmatpush1.msra.mxu0 %v500
    %509 = vmatprep.subr.mxu0 0.0
    %510 = vmatpush1.msra.mxu0 0.0
    %511 = vmatprep.subr.mxu0 0.0
    %512 = vmatpush1.msra.mxu0 0.0
    %513 = vmatprep.subr.mxu0 0.0
    %514 = vmatpush1.msra.mxu0 0.0
    %515 = vmatprep.subr.mxu0 0.0
    %516 = vmatpush1.msra.mxu0 0.0
    %517 = vmatprep.subr.mxu0 0.0
    %518 = vmatpush1.msra.mxu0 0.0
    %519 = vmatprep.subr.mxu0 0.0
    %520 = vmatpush1.msra.mxu0 0.0
    %521 = vmatprep.subr.mxu0 0.0
    %522 = vmatpush1.msra.mxu0 0.0
    %523 = vmatprep.subr.mxu0 0.0
    %524 = vmatpush1.msra.mxu0 0.0
    %525 = vmatprep.subr.mxu0 0.0
    %526 = vmatpush1.msra.mxu0 0.0
    %527 = vmatprep.subr.mxu0 0.0
    %528 = vmatpush1.msra.mxu0 0.0
    %529 = vmatprep.subr.mxu0 0.0
    %530 = vmatpush1.msra.mxu0 0.0
    %531 = vmatprep.subr.mxu0 0.0
    %532 = vmatpush1.msra.mxu0 0.0
    %533 = vmatprep.subr.mxu0 0.0
    %534 = vmatpush1.msra.mxu0 0.0
    %535 = vmatprep.subr.mxu0 0.0
    %536 = vmatpush1.msra.mxu0 0.0
    %537 = vmatprep.subr.mxu0 0.0
    %538 = vmatpush1.msra.mxu0 0.0
    %539 = vmatprep.subr.mxu0 0.0
    %540 = vmatpush1.msra.mxu0 0.0
    %541 = vmatprep.subr.mxu0 0.0
    %542 = vmatpush1.msra.mxu0 0.0
    %543 = vmatprep.subr.mxu0 0.0
    %544 = vmatpush1.msra.mxu0 0.0
    %545 = vmatprep.subr.mxu0 0.0
    %546 = vmatpush1.msra.mxu0 0.0
    %547 = vmatprep.subr.mxu0 0.0
    %548 = vmatpush1.msra.mxu0 0.0
    %549 = vmatprep.subr.mxu0 0.0
    %550 = vmatpush1.msra.mxu0 0.0
    %551 = vmatprep.subr.mxu0 0.0
    %552 = vmatpush1.msra.mxu0 0.0
    %553 = vmatprep.subr.mxu0 0.0
    %554 = vmatpush1.msra.mxu0 0.0
    %555 = vmatprep.subr.mxu0 0.0
    %556 = vmatpush1.msra.mxu0 0.0
    %557 = vmatprep.subr.mxu0 0.0
    %558 = vmatpush1.msra.mxu0 0.0
    %559 = vmatprep.subr.mxu0 0.0
    %560 = vmatpush1.msra.mxu0 0.0
    %561 = vmatprep.subr.mxu0 0.0
    %562 = vmatpush1.msra.mxu0 0.0
    %563 = vmatprep.subr.mxu0 0.0
    %564 = vmatpush1.msra.mxu0 0.0
    %565 = vmatprep.subr.mxu0 0.0
    %566 = vmatpush1.msra.mxu0 0.0
    %567 = vmatprep.subr.mxu0 0.0
    %568 = vmatpush1.msra.mxu0 0.0
    %569 = vmatprep.mubr.f32.mxu0 0.0
    %570 = vmatmul.mubr.f32.gmra.mrb[0].mxu0 %v496
    %v571 = vpop.f32.mrb[0].mxu0
    %v572 = vadd.f32 0.0, %v571
    %v573 = vpop.f32.mrb[0].mxu0
    %v574 = vadd.f32 0.0, %v573
    %575 = vdwg.mxu0
    %v576 = vadd.f32 %v225, %v572
    %v577 = vadd.f32 %v227, %v574
    %v578 = vmax.f32 %v576, 0.0
    %v579 = vmax.f32 %v577, 0.0
    %s580 = scalar_lea.vmem [#allocation2], 512
    %v581 = vld [vmem:[%s580] sm:$0xff]
    %v582 = vld [vmem:[%s580 + $0x8] sm:$0xff]
    %v583 = vld [vmem:[%s580 + $0x10] sm:$0xff]
    %v584 = vld [vmem:[%s580 + $0x18] sm:$0xff]
    %v585 = vld [vmem:[%s580 + $0x20] sm:$0xff]
    %v586 = vld [vmem:[%s580 + $0x28] sm:$0xff]
    %v587 = vld [vmem:[%s580 + $0x30] sm:$0xff]
    %v588 = vld [vmem:[%s580 + $0x38] sm:$0xff]
    %v589 = vld [vmem:[%s580 + $0x40] sm:$0xff]
    %v590 = vld [vmem:[%s580 + $0x48] sm:$0xff]
    %v591 = vld [vmem:[%s580 + $0x50] sm:$0xff]
    %v592 = vld [vmem:[%s580 + $0x58] sm:$0xff]
    %v593 = vld [vmem:[%s580 + $0x60] sm:$0xff]
    %v594 = vld [vmem:[%s580 + $0x68] sm:$0xff]
    %v595 = vld [vmem:[%s580 + $0x70] sm:$0xff]
    %v596 = vld [vmem:[%s580 + $0x78] sm:$0xff]
    %v597 = vld [vmem:[%s580 + $0x80] sm:$0xff]
    %v598 = vld [vmem:[%s580 + $0x88] sm:$0xff]
    %v599 = vld [vmem:[%s580 + $0x90] sm:$0xff]
    %v600 = vld [vmem:[%s580 + $0x98] sm:$0xff]
    %v601 = vld [vmem:[%s580 + $0xa0] sm:$0xff]
    %v602 = vld [vmem:[%s580 + $0xa8] sm:$0xff]
    %v603 = vld [vmem:[%s580 + $0xb0] sm:$0xff]
    %v604 = vld [vmem:[%s580 + $0xb8] sm:$0xff]
    %v605 = vld [vmem:[%s580 + $0xc0] sm:$0xff]
    %v606 = vld [vmem:[%s580 + $0xc8] sm:$0xff]
    %v607 = vld [vmem:[%s580 + $0xd0] sm:$0xff]
    %v608 = vld [vmem:[%s580 + $0xd8] sm:$0xff]
    %v609 = vld [vmem:[%s580 + $0xe0] sm:$0xff]
    %v610 = vld [vmem:[%s580 + $0xe8] sm:$0xff]
    %v611 = vld [vmem:[%s580 + $0xf0] sm:$0xff]
    %v612 = vld [vmem:[%s580 + $0xf8] sm:$0xff]
    %v613 = vld [vmem:[%s580 + $0x100] sm:$0xff]
    %v614 = vld [vmem:[%s580 + $0x108] sm:$0xff]
    %v615 = vld [vmem:[%s580 + $0x110] sm:$0xff]
    %v616 = vld [vmem:[%s580 + $0x118] sm:$0xff]
    %v617 = vld [vmem:[%s580 + $0x120] sm:$0xff]
    %v618 = vld [vmem:[%s580 + $0x128] sm:$0xff]
    %v619 = vld [vmem:[%s580 + $0x130] sm:$0xff]
    %v620 = vld [vmem:[%s580 + $0x138] sm:$0xff]
    %v621 = vld [vmem:[%s580 + $0x140] sm:$0xff]
    %v622 = vld [vmem:[%s580 + $0x148] sm:$0xff]
    %v623 = vld [vmem:[%s580 + $0x150] sm:$0xff]
    %v624 = vld [vmem:[%s580 + $0x158] sm:$0xff]
    %v625 = vld [vmem:[%s580 + $0x160] sm:$0xff]
    %v626 = vld [vmem:[%s580 + $0x168] sm:$0xff]
    %v627 = vld [vmem:[%s580 + $0x170] sm:$0xff]
    %v628 = vld [vmem:[%s580 + $0x178] sm:$0xff]
    %v629 = vld [vmem:[%s580 + $0x180] sm:$0xff]
    %v630 = vld [vmem:[%s580 + $0x188] sm:$0xff]
    %v631 = vld [vmem:[%s580 + $0x190] sm:$0xff]
    %v632 = vld [vmem:[%s580 + $0x198] sm:$0xff]
    %v633 = vld [vmem:[%s580 + $0x1a0] sm:$0xff]
    %v634 = vld [vmem:[%s580 + $0x1a8] sm:$0xff]
    %v635 = vld [vmem:[%s580 + $0x1b0] sm:$0xff]
    %v636 = vld [vmem:[%s580 + $0x1b8] sm:$0xff]
    %v637 = vld [vmem:[%s580 + $0x1c0] sm:$0xff]
    %v638 = vld [vmem:[%s580 + $0x1c8] sm:$0xff]
    %v639 = vld [vmem:[%s580 + $0x1d0] sm:$0xff]
    %v640 = vld [vmem:[%s580 + $0x1d8] sm:$0xff]
    %v641 = vld [vmem:[%s580 + $0x1e0] sm:$0xff]
    %v642 = vld [vmem:[%s580 + $0x1e8] sm:$0xff]
    %v643 = vld [vmem:[%s580 + $0x1f0] sm:$0xff]
    %v644 = vld [vmem:[%s580 + $0x1f8] sm:$0xff]
    %s645 = scalar_lea.vmem %s4, 2
    %v646 = vld [vmem:[%s645] sm:$0x3]
    %v648 = vlaneseq
    %v649 = vshrl.u32 %v648, 7
    %v650 = vsub.s32 0, %v649
    %v651 = vrot.slane %v646, %v650
    %v652 = vlaneseq
    %v653 = vshrl.u32 %v652, 7
    %v654 = vsub.s32 1, %v653
    %v655 = vrot.slane %v646, %v654
    %658 = vmatprep.subr.mxu0 %v582
    %659 = vmatpush1.msra.mxu0 %v581
    %660 = vmatprep.subr.mxu0 %v584
    %661 = vmatpush1.msra.mxu0 %v583
    %662 = vmatprep.subr.mxu0 %v586
    %663 = vmatpush1.msra.mxu0 %v585
    %664 = vmatprep.subr.mxu0 %v588
    %665 = vmatpush1.msra.mxu0 %v587
    %666 = vmatprep.subr.mxu0 %v590
    %667 = vmatpush1.msra.mxu0 %v589
    %668 = vmatprep.subr.mxu0 %v592
    %669 = vmatpush1.msra.mxu0 %v591
    %670 = vmatprep.subr.mxu0 %v594
    %671 = vmatpush1.msra.mxu0 %v593
    %672 = vmatprep.subr.mxu0 %v596
    %673 = vmatpush1.msra.mxu0 %v595
    %674 = vmatprep.subr.mxu0 %v598
    %675 = vmatpush1.msra.mxu0 %v597
    %676 = vmatprep.subr.mxu0 %v600
    %677 = vmatpush1.msra.mxu0 %v599
    %678 = vmatprep.subr.mxu0 %v602
    %679 = vmatpush1.msra.mxu0 %v601
    %680 = vmatprep.subr.mxu0 %v604
    %681 = vmatpush1.msra.mxu0 %v603
    %682 = vmatprep.subr.mxu0 %v606
    %683 = vmatpush1.msra.mxu0 %v605
    %684 = vmatprep.subr.mxu0 %v608
    %685 = vmatpush1.msra.mxu0 %v607
    %686 = vmatprep.subr.mxu0 %v610
    %687 = vmatpush1.msra.mxu0 %v609
    %688 = vmatprep.subr.mxu0 %v612
    %689 = vmatpush1.msra.mxu0 %v611
    %690 = vmatprep.subr.mxu0 %v614
    %691 = vmatpush1.msra.mxu0 %v613
    %692 = vmatprep.subr.mxu0 %v616
    %693 = vmatpush1.msra.mxu0 %v615
    %694 = vmatprep.subr.mxu0 %v618
    %695 = vmatpush1.msra.mxu0 %v617
    %696 = vmatprep.subr.mxu0 %v620
    %697 = vmatpush1.msra.mxu0 %v619
    %698 = vmatprep.subr.mxu0 %v622
    %699 = vmatpush1.msra.mxu0 %v621
    %700 = vmatprep.subr.mxu0 %v624
    %701 = vmatpush1.msra.mxu0 %v623
    %702 = vmatprep.subr.mxu0 %v626
    %703 = vmatpush1.msra.mxu0 %v625
    %704 = vmatprep.subr.mxu0 %v628
    %705 = vmatpush1.msra.mxu0 %v627
    %706 = vmatprep.subr.mxu0 %v630
    %707 = vmatpush1.msra.mxu0 %v629
    %708 = vmatprep.subr.mxu0 %v632
    %709 = vmatpush1.msra.mxu0 %v631
    %710 = vmatprep.subr.mxu0 %v634
    %711 = vmatpush1.msra.mxu0 %v633
    %712 = vmatprep.subr.mxu0 %v636
    %713 = vmatpush1.msra.mxu0 %v635
    %714 = vmatprep.subr.mxu0 %v638
    %715 = vmatpush1.msra.mxu0 %v637
    %716 = vmatprep.subr.mxu0 %v640
    %717 = vmatpush1.msra.mxu0 %v639
    %718 = vmatprep.subr.mxu0 %v642
    %719 = vmatpush1.msra.mxu0 %v641
    %720 = vmatprep.subr.mxu0 %v644
    %721 = vmatpush1.msra.mxu0 %v643
    %722 = vmatprep.mubr.f32.mxu0 %v579
    %723 = vmatmul.mubr.f32.gmra.mrb[0].mxu0 %v578
    %v724 = vpop.f32.mrb[0].mxu0
    %v725 = vadd.f32 %v651, %v724
    %v726 = vpop.f32.mrb[0].mxu0
    %v727 = vadd.f32 %v655, %v726
    %728 = vdwg.mxu0
    %v729 = vmax.f32 %v725, 0.0
    %v730 = vmax.f32 %v727, 0.0
    %s731 = scalar_lea.vmem %s5, 256
    %v732 = vld [vmem:[%s731] sm:$0xff]
    %v733 = vld [vmem:[%s731 + $0x8] sm:$0xff]
    %v734 = vld [vmem:[%s731 + $0x10] sm:$0xff]
    %v735 = vld [vmem:[%s731 + $0x18] sm:$0xff]
    %v736 = vld [vmem:[%s731 + $0x20] sm:$0xff]
    %v737 = vld [vmem:[%s731 + $0x28] sm:$0xff]
    %v738 = vld [vmem:[%s731 + $0x30] sm:$0xff]
    %v739 = vld [vmem:[%s731 + $0x38] sm:$0xff]
    %v740 = vld [vmem:[%s731 + $0x40] sm:$0xff]
    %v741 = vld [vmem:[%s731 + $0x48] sm:$0xff]
    %v742 = vld [vmem:[%s731 + $0x50] sm:$0xff]
    %v743 = vld [vmem:[%s731 + $0x58] sm:$0xff]
    %v744 = vld [vmem:[%s731 + $0x60] sm:$0xff]
    %v745 = vld [vmem:[%s731 + $0x68] sm:$0xff]
    %v746 = vld [vmem:[%s731 + $0x70] sm:$0xff]
    %v747 = vld [vmem:[%s731 + $0x78] sm:$0xff]
    %v748 = vld [vmem:[%s731 + $0x80] sm:$0xff]
    %v749 = vld [vmem:[%s731 + $0x88] sm:$0xff]
    %v750 = vld [vmem:[%s731 + $0x90] sm:$0xff]
    %v751 = vld [vmem:[%s731 + $0x98] sm:$0xff]
    %v752 = vld [vmem:[%s731 + $0xa0] sm:$0xff]
    %v753 = vld [vmem:[%s731 + $0xa8] sm:$0xff]
    %v754 = vld [vmem:[%s731 + $0xb0] sm:$0xff]
    %v755 = vld [vmem:[%s731 + $0xb8] sm:$0xff]
    %v756 = vld [vmem:[%s731 + $0xc0] sm:$0xff]
    %v757 = vld [vmem:[%s731 + $0xc8] sm:$0xff]
    %v758 = vld [vmem:[%s731 + $0xd0] sm:$0xff]
    %v759 = vld [vmem:[%s731 + $0xd8] sm:$0xff]
    %v760 = vld [vmem:[%s731 + $0xe0] sm:$0xff]
    %v761 = vld [vmem:[%s731 + $0xe8] sm:$0xff]
    %v762 = vld [vmem:[%s731 + $0xf0] sm:$0xff]
    %v763 = vld [vmem:[%s731 + $0xf8] sm:$0xff]
    %s764 = scalar_lea.vmem %s6, 1
    %v765 = vld [vmem:[%s764] sm:$0x1]
    %v767 = vlaneseq
    %v768 = vshrl.u32 %v767, 7
    %v769 = vsub.s32 0, %v768
    %v770 = vrot.slane %v765, %v769
    %772 = vmatprep.subr.mxu0 0.0
    %773 = vmatpush1.msra.mxu0 %v732
    %774 = vmatprep.subr.mxu0 0.0
    %775 = vmatpush1.msra.mxu0 %v733
    %776 = vmatprep.subr.mxu0 0.0
    %777 = vmatpush1.msra.mxu0 %v734
    %778 = vmatprep.subr.mxu0 0.0
    %779 = vmatpush1.msra.mxu0 %v735
    %780 = vmatprep.subr.mxu0 0.0
    %781 = vmatpush1.msra.mxu0 %v736
    %782 = vmatprep.subr.mxu0 0.0
    %783 = vmatpush1.msra.mxu0 %v737
    %784 = vmatprep.subr.mxu0 0.0
    %785 = vmatpush1.msra.mxu0 %v738
    %786 = vmatprep.subr.mxu0 0.0
    %787 = vmatpush1.msra.mxu0 %v739
    %788 = vmatprep.subr.mxu0 0.0
    %789 = vmatpush1.msra.mxu0 %v740
    %790 = vmatprep.subr.mxu0 0.0
    %791 = vmatpush1.msra.mxu0 %v741
    %792 = vmatprep.subr.mxu0 0.0
    %793 = vmatpush1.msra.mxu0 %v742
    %794 = vmatprep.subr.mxu0 0.0
    %795 = vmatpush1.msra.mxu0 %v743
    %796 = vmatprep.subr.mxu0 0.0
    %797 = vmatpush1.msra.mxu0 %v744
    %798 = vmatprep.subr.mxu0 0.0
    %799 = vmatpush1.msra.mxu0 %v745
    %800 = vmatprep.subr.mxu0 0.0
    %801 = vmatpush1.msra.mxu0 %v746
    %802 = vmatprep.subr.mxu0 0.0
    %803 = vmatpush1.msra.mxu0 %v747
    %804 = vmatprep.subr.mxu0 0.0
    %805 = vmatpush1.msra.mxu0 %v748
    %806 = vmatprep.subr.mxu0 0.0
    %807 = vmatpush1.msra.mxu0 %v749
    %808 = vmatprep.subr.mxu0 0.0
    %809 = vmatpush1.msra.mxu0 %v750
    %810 = vmatprep.subr.mxu0 0.0
    %811 = vmatpush1.msra.mxu0 %v751
    %812 = vmatprep.subr.mxu0 0.0
    %813 = vmatpush1.msra.mxu0 %v752
    %814 = vmatprep.subr.mxu0 0.0
    %815 = vmatpush1.msra.mxu0 %v753
    %816 = vmatprep.subr.mxu0 0.0
    %817 = vmatpush1.msra.mxu0 %v754
    %818 = vmatprep.subr.mxu0 0.0
    %819 = vmatpush1.msra.mxu0 %v755
    %820 = vmatprep.subr.mxu0 0.0
    %821 = vmatpush1.msra.mxu0 %v756
    %822 = vmatprep.subr.mxu0 0.0
    %823 = vmatpush1.msra.mxu0 %v757
    %824 = vmatprep.subr.mxu0 0.0
    %825 = vmatpush1.msra.mxu0 %v758
    %826 = vmatprep.subr.mxu0 0.0
    %827 = vmatpush1.msra.mxu0 %v759
    %828 = vmatprep.subr.mxu0 0.0
    %829 = vmatpush1.msra.mxu0 %v760
    %830 = vmatprep.subr.mxu0 0.0
    %831 = vmatpush1.msra.mxu0 %v761
    %832 = vmatprep.subr.mxu0 0.0
    %833 = vmatpush1.msra.mxu0 %v762
    %834 = vmatprep.subr.mxu0 0.0
    %835 = vmatpush1.msra.mxu0 %v763
    %836 = vmatprep.mubr.f32.mxu0 %v730
    %837 = vmatmul.mubr.f32.gmra.mrb[0].mxu0 %v729
    %v838 = vpop.f32.mrb[0].mxu0
    %v839 = vadd.f32 %v770, %v838
    %v840 = vpop.f32.mrb[0].mxu0
    %841 = vdwg.mxu0
    %v842 = vadd.f32 %v489, %v839
    %843 = vst.msk [vmem:[%s8] sm:$0xff] %vm494, %v842
    // Predicated region
    $region38: #{physics_informed_policy_forward.1} parent=1 // pred_check
      _
    $region39: #{physics_informed_policy_forward.1} parent=1 // pred_check_branch
      %845 = sbr.rel (0) target = $region41
    $region40: #{physics_informed_policy_forward.1} parent=1 // pred_region
      _
    $region41: #{physics_informed_policy_forward.1} parent=1 // pred_fallthru
      _
    // Predicated region
    $region42: #{physics_informed_policy_forward.1} parent=1 // pred_check
      _
    $region43: #{physics_informed_policy_forward.1} parent=1 // pred_check_branch
      %847 = sbr.rel (0) target = $region45
    $region44: #{physics_informed_policy_forward.1} parent=1 // pred_region
      _
    $region45: #{physics_informed_policy_forward.1} parent=1 // pred_fallthru
      _
    %848 = vsyncpa [#allocation3], 1

</llo_original>
